<compile_context>
chip_gen: v6e
topology: v6e:2x2x1
jax: 0.10.0
libtpu: 0.0.40
codegen_flags: <defaults>
</compile_context>

<pallas_src>
import functools

import jax
import jax.numpy as jnp
from jax.experimental import pallas as pl
from jax.experimental.pallas import tpu as pltpu


# ---------------------------------------------------------------------------
# compiler params
# ---------------------------------------------------------------------------

def _vmem_limit_bytes():
    # Large conv tiles need ~20-24 MiB of VMEM; raise the scoped limit (v5e default is
    # 16 MiB) while staying well under v7x's 64 MiB physical VMEM.
    try:
        cap = pltpu.get_tpu_info().vmem_capacity_bytes
        return int(min(48 * 1024 * 1024, (cap * 3) // 4))
    except Exception:
        return 48 * 1024 * 1024


_VMEM_LIMIT = _vmem_limit_bytes()


def _compiler_params(ndims):
    return pltpu.CompilerParams(
        dimension_semantics=tuple(["parallel"] * ndims),
        vmem_limit_bytes=_VMEM_LIMIT,
    )


# ---------------------------------------------------------------------------
# Pallas kernels
# ---------------------------------------------------------------------------

def _upconv_kernel(x_ref, w_ref, s_ref, o_ref):
    # out = x @ w + shift   (conv bias / dequant affine already folded into w, shift)
    y = jnp.dot(x_ref[...], w_ref[...], preferred_element_type=jnp.float32)
    o_ref[...] = (y + s_ref[...]).astype(o_ref.dtype)


def _conv3x3_kernel(a_ref, b_ref, w_ref, s_ref, o_ref, *, act, residual):
    # a_ref: (th,  W+2, Cin) aligned row tile of the zero-padded input (bf16)
    # b_ref: (2,   W+2, Cin) the 2-row halo just below the tile (same array, 2nd BlockSpec)
    # w_ref: (9*Cin, Cout)   conv weights with the BN scale folded in (bf16)
    # s_ref: (1, Cout)       f32 bias + BN shift
    # o_ref: (th*W, Cout)    output pixel rows
    th, wp, cin = a_ref.shape
    W = wp - 2
    win = jnp.concatenate([a_ref[...], b_ref[...]], axis=0)          # (th+2, W+2, Cin)

    # in-VMEM im2col: 9 shifted taps concatenated along K (order (dh, dw, ci))
    pieces = [
        win[dh:dh + th, dw:dw + W, :].reshape(th * W, cin)
        for dh in range(3) for dw in range(3)
    ]
    xcol = jnp.concatenate(pieces, axis=-1)                          # (th*W, 9*Cin) bf16

    y = jnp.dot(xcol, w_ref[...], preferred_element_type=jnp.float32)
    y = y + s_ref[...]                                               # f32 epilogue
    if act == "relu":
        y = jnp.maximum(y, 0.0)
    elif act == "sigmoid":
        y = jax.nn.sigmoid(y)
    if residual:
        # x + conv_block(x): the residual is the center tap (dh=1, dw=1) already in VMEM.
        y = y + pieces[4].astype(jnp.float32)
    o_ref[...] = y.astype(o_ref.dtype)


# ---------------------------------------------------------------------------
# layer wrappers
# ---------------------------------------------------------------------------

def upconv_mats(w, b):
    """ConvTranspose2d(k=2, s=2) weight (Cin, Cout, 2, 2) -> (Cin, 4*Cout) matmul form
    (columns ordered (di, dj, co)) and the matching per-column bias."""
    cin, cout = w.shape[0], w.shape[1]
    wmat = jnp.transpose(w, (0, 2, 3, 1)).reshape(cin, 4 * cout)
    shift = jnp.tile(b, 4)
    return wmat, shift


def conv_transpose_2x2(x, wmat, shift):
    """ConvTranspose2d(kernel=2, stride=2).  x:(H,W,Cin); wmat:(Cin,4*Cout); shift:(4*Cout,).
    Returns the interleaved (2H, 2W, Cout) NHWC output in bf16."""
    H, W, Cin = x.shape
    N = wmat.shape[1]
    Cout = N // 4
    M = H * W
    tm = min(M, min(4096, max(128, M // 2)))
    if M % tm:
        tm = M

    y = pl.pallas_call(
        _upconv_kernel,
        out_shape=jax.ShapeDtypeStruct((M, N), jnp.bfloat16),
        grid_spec=pltpu.PrefetchScalarGridSpec(
            num_scalar_prefetch=0,
            grid=(M // tm,),
            in_specs=[
                pl.BlockSpec((tm, Cin), lambda i: (i, 0)),
                pl.BlockSpec((Cin, N), lambda i: (0, 0)),
                pl.BlockSpec((1, N), lambda i: (0, 0)),
            ],
            out_specs=pl.BlockSpec((tm, N), lambda i: (i, 0)),
        ),
        compiler_params=_compiler_params(1),
    )(x.reshape(M, Cin).astype(jnp.bfloat16),
      wmat.astype(jnp.bfloat16),
      shift.reshape(1, N).astype(jnp.float32))

    # interleave the (di, dj) factors into the spatial dims: (H,W,2,2,Co) -> (2H,2W,Co).
    # TODO(synk): fold this interleave (and the next layer's zero-padding) into the Pallas
    # kernels to remove one XLA copy per up-sampled activation.
    y = y.reshape(H, W, 2, 2, Cout)
    y = jnp.transpose(y, (0, 2, 1, 3, 4)).reshape(2 * H, 2 * W, Cout)
    return y


def _pick_row_tile(H, W):
    th = max(2, min(H // 2, 4096 // W))
    while th > 2 and (H % th or th % 2):
        th -= 1
    return th


def conv3x3_bn_act(x, w, b, gamma, beta, mean, var, *, act="relu", residual=False,
                   eps=1e-5, out_dtype=jnp.bfloat16):
    """Conv2d(3x3, pad=1) + BatchNorm(eval) + activation (+ input residual).
    x:(H,W,Cin) bf16; w:(Cout,Cin,3,3) torch layout.  Returns (H, W, Cout)."""
    H, W, Cin = x.shape
    Cout = w.shape[0]
    assert H % 2 == 0 and W % 8 == 0

    bn_scale = gamma / jnp.sqrt(var + eps)
    wmat = jnp.transpose(w, (2, 3, 1, 0)).reshape(9 * Cin, Cout)        # rows ordered (dh,dw,ci)
    wmat = (wmat * bn_scale[None, :]).astype(jnp.bfloat16)              # BN scale folded in
    shift = ((b - mean) * bn_scale + beta).reshape(1, Cout).astype(jnp.float32)

    xpad = jnp.pad(x.astype(jnp.bfloat16), ((1, 1), (1, 1), (0, 0)))    # (H+2, W+2, Cin)
    th = _pick_row_tile(H, W)
    grid = (H // th,)

    out = pl.pallas_call(
        functools.partial(_conv3x3_kernel, act=act, residual=residual),
        out_shape=jax.ShapeDtypeStruct((H * W, Cout), out_dtype),
        grid_spec=pltpu.PrefetchScalarGridSpec(
            num_scalar_prefetch=0,
            grid=grid,
            in_specs=[
                pl.BlockSpec((th, W + 2, Cin), lambda i: (i, 0, 0)),               # row tile
                pl.BlockSpec((2, W + 2, Cin),
                             lambda i: ((i + 1) * (th // 2), 0, 0)),               # 2-row halo
                pl.BlockSpec((9 * Cin, Cout), lambda i: (0, 0)),                   # weights
                pl.BlockSpec((1, Cout), lambda i: (0, 0)),                         # shift
            ],
            out_specs=pl.BlockSpec((th * W, Cout), lambda i: (i, 0)),
        ),
        compiler_params=_compiler_params(1),
    )(xpad, xpad, wmat, shift)
    return out.reshape(H, W, Cout)
    # TODO(synk): for the last layer (Cout=3) a transposed, lane-dense matmul (W^T @ X^T)
    # would avoid the narrow-N MXU/store inefficiency; not implemented here.


# ---------------------------------------------------------------------------
# Decoder forward (matches the PyTorch module graph; residual AFTER the ReLU block)
# ---------------------------------------------------------------------------

def decoder_forward(x, params, level):
    x = x.reshape(512, 16, 16)                                   # NCHW (batch 1 squeezed)
    x = jnp.transpose(x, (1, 2, 0)).astype(jnp.bfloat16)         # -> NHWC (16,16,512)

    # upconv1 with the dequantization affine (x - 0.5) / 2**level folded in
    w1, s1 = upconv_mats(params["up1_w"], params["up1_b"])
    inv = 1.0 / (2.0 ** level)
    s1 = s1 - 0.5 * inv * jnp.sum(w1, axis=0)
    w1 = w1 * inv

    x = conv_transpose_2x2(x, w1, s1)                                            # (32,32,256)
    x = conv3x3_bn_act(x, *params["c2"], act="relu", residual=True)
    x = conv_transpose_2x2(x, *upconv_mats(params["up2_w"], params["up2_b"]))    # (64,64,128)
    x = conv3x3_bn_act(x, *params["c3"], act="relu", residual=True)
    x = conv_transpose_2x2(x, *upconv_mats(params["up3_w"], params["up3_b"]))    # (128,128,64)
    x = conv3x3_bn_act(x, *params["c4"], act="relu", residual=True)
    x = conv_transpose_2x2(x, *upconv_mats(params["up4_w"], params["up4_b"]))    # (256,256,32)
    x = conv3x3_bn_act(x, *params["c5"], act="relu", residual=True)
    x = conv_transpose_2x2(x, *upconv_mats(params["up5_w"], params["up5_b"]))    # (512,512,16)
    x = conv3x3_bn_act(x, *params["c6"], act="sigmoid", residual=False,
                       out_dtype=jnp.float32)                                    # (512,512,3)

    return jnp.transpose(x, (2, 0, 1))[None]                     # -> NCHW (1, 3, 512, 512)


# ---------------------------------------------------------------------------
# deterministic synthetic parameters (not a checkpoint)
# ---------------------------------------------------------------------------

def init_params(key):
    keys = iter(jax.random.split(key, 64))

    def nrm(shape, s=0.05):
        return (s * jax.random.normal(next(keys), shape)).astype(jnp.float32)

    def bn(c):
        g = (1.0 + nrm((c,), 0.1)).astype(jnp.float32)
        b = nrm((c,), 0.1)
        m = nrm((c,), 0.1)
        v = (1.0 + 0.5 * jax.random.uniform(next(keys), (c,))).astype(jnp.float32)
        return g, b, m, v

    p = {}
    for i, (ci, co) in enumerate([(512, 256), (256, 128), (128, 64), (64, 32), (32, 16)], 1):
        p[f"up{i}_w"] = nrm((ci, co, 2, 2))       # ConvTranspose2d weight (Cin, Cout, 2, 2)
        p[f"up{i}_b"] = nrm((co,))
    for name, ci, co in [("c2", 256, 256), ("c3", 128, 128), ("c4", 64, 64),
                         ("c5", 32, 32), ("c6", 16, 3)]:
        p[name] = (nrm((co, ci, 3, 3)), nrm((co,))) + bn(co)   # Conv2d weight (Cout, Cin, 3, 3)
    return p


# ---------------------------------------------------------------------------

if __name__ == "__main__":
    key = jax.random.PRNGKey(0)
    kx, kp, kt = jax.random.split(key, 3)
    level = 4   # the original module reads this from a config file

    # ---- small numeric checks of the Pallas kernels against jnp references ----
    k1, k2, k3, k4, k5, k6, k7 = jax.random.split(kt, 7)

    # transposed-conv kernel
    H0, Ci0, Co0 = 16, 16, 8
    xt = jax.random.normal(k1, (H0, H0, Ci0), jnp.float32)
    wt = 0.1 * jax.random.normal(k2, (Ci0, Co0, 2, 2), jnp.float32)
    bt = 0.1 * jax.random.normal(k3, (Co0,), jnp.float32)
    got = conv_transpose_2x2(xt.astype(jnp.bfloat16), *upconv_mats(wt, bt)).astype(jnp.float32)
    ref = jnp.einsum("hwi,iocd->hcwdo", xt, wt).reshape(2 * H0, 2 * H0, Co0) + bt
    assert bool(jnp.allclose(got, ref, rtol=8e-2, atol=8e-2)), "conv-transpose kernel mismatch"

    # conv3x3 + BN + relu + residual kernel
    H1, C1 = 16, 8
    xc = jax.random.normal(k4, (H1, H1, C1), jnp.float32)
    wc = 0.1 * jax.random.normal(k5, (C1, C1, 3, 3), jnp.float32)
    bc = 0.1 * jax.random.normal(k6, (C1,), jnp.float32)
    g = 1.0 + 0.1 * jax.random.normal(k7, (C1,), jnp.float32)
    be = jnp.full((C1,), 0.05, jnp.float32)
    mu = jnp.full((C1,), 0.02, jnp.float32)
    va = jnp.full((C1,), 1.3, jnp.float32)
    got = conv3x3_bn_act(xc.astype(jnp.bfloat16), wc, bc, g, be, mu, va,
                         act="relu", residual=True).astype(jnp.float32)
    sc = g / jnp.sqrt(va + 1e-5)
    xp_ref = jnp.pad(xc, ((1, 1), (1, 1), (0, 0)))
    cols = jnp.concatenate([xp_ref[dh:dh + H1, dw:dw + H1, :]
                            for dh in range(3) for dw in range(3)],
                           axis=-1).reshape(H1 * H1, 9 * C1)
    wm = jnp.transpose(wc, (2, 3, 1, 0)).reshape(9 * C1, C1)
    ref = cols @ wm * sc + ((bc - mu) * sc + be)
    ref = (jnp.maximum(ref, 0.0) + xc.reshape(H1 * H1, C1)).reshape(H1, H1, C1)
    assert bool(jnp.allclose(got, ref, rtol=8e-2, atol=8e-2)), "conv3x3 kernel mismatch"

    # ---- full decoder forward ----
    x = jax.random.randint(kx, (1, 512, 16, 16), 0, 2 ** level).astype(jnp.float32)
    params = init_params(kp)

    fwd = jax.jit(functools.partial(decoder_forward, level=level))
    out = jax.block_until_ready(fwd(x, params))

    assert out.shape == (1, 3, 512, 512), out.shape
    assert bool(jnp.isfinite(out).all())
    assert bool(((out >= 0.0) & (out <= 1.0)).all())   # sigmoid output range
    print("KERNEL_OK")
</pallas_src>

<mosaic_0001>
module attributes {stable_mosaic.version = 11 : i64} {
  func.func @_upconv_kernel(%arg0: i32, %arg1: memref<128x16xbf16, #tpu.memory_space<vmem>>, %arg2: memref<16x32xbf16, #tpu.memory_space<vmem>>, %arg3: memref<1x32xf32, #tpu.memory_space<vmem>>, %arg4: memref<128x32xbf16, #tpu.memory_space<vmem>>) attributes {dimension_semantics = [#tpu.dimension_semantics<parallel>], iteration_bounds = array<i64: 2>, scalar_prefetch = 0 : i64, scratch_operands = 0 : i64, tpu.core_type = #tpu.core_type<tc>, window_params = [{transform_indices = @transform_0, window_bounds = array<i64: 128, 16>}, {pipeline_mode = #tpu.pipeline_mode<synchronous>, transform_indices = @transform_1, window_bounds = array<i64: 16, 32>}, {pipeline_mode = #tpu.pipeline_mode<synchronous>, transform_indices = @transform_2, window_bounds = array<i64: 1, 32>}, {transform_indices = @transform_3, window_bounds = array<i64: 128, 32>}]} {
    %c0 = arith.constant 0 : index
    %c0_0 = arith.constant 0 : index
    %0 = vector.load %arg1[%c0, %c0_0] : memref<128x16xbf16, #tpu.memory_space<vmem>>, vector<128x16xbf16>
    %c0_1 = arith.constant 0 : index
    %c0_2 = arith.constant 0 : index
    %1 = vector.load %arg2[%c0_1, %c0_2] : memref<16x32xbf16, #tpu.memory_space<vmem>>, vector<16x32xbf16>
    %cst = arith.constant dense<0.000000e+00> : vector<128x32xf32>
    %2 = tpu.matmul %0, %1, %cst {dimension_numbers = #tpu.dot_dimension_numbers<[1], [0], [0], [1], [0, 0, 1, 1], [], []>} : vector<128x16xbf16>, vector<16x32xbf16>, vector<128x32xf32> -> vector<128x32xf32>
    %c0_3 = arith.constant 0 : index
    %c0_4 = arith.constant 0 : index
    %3 = vector.load %arg3[%c0_3, %c0_4] : memref<1x32xf32, #tpu.memory_space<vmem>>, vector<1x32xf32>
    %4 = vector.broadcast %3 : vector<1x32xf32> to vector<128x32xf32>
    %5 = arith.addf %2, %4 : vector<128x32xf32>
    %6 = arith.truncf %5 : vector<128x32xf32> to vector<128x32xbf16>
    %c0_5 = arith.constant 0 : index
    %c0_6 = arith.constant 0 : index
    %7 = vector.load %arg4[%c0_5, %c0_6] : memref<128x32xbf16, #tpu.memory_space<vmem>>, vector<128x32xbf16>
    tpu.vector_store %arg4[%c0_5, %c0_6], %6 {strides = array<i32>} : memref<128x32xbf16, #tpu.memory_space<vmem>>, vector<128x32xbf16>,
    return
  }
  func.func @transform_0(%arg0: i32) -> (i32, i32) {
    %c0_i32 = arith.constant 0 : i32
    %c0_i32_0 = arith.constant 0 : i32
    return %arg0, %c0_i32 : i32, i32
  }
  func.func @transform_1(%arg0: i32) -> (i32, i32) {
    %c0_i32 = arith.constant 0 : i32
    %c0_i32_0 = arith.constant 0 : i32
    %c0_i32_1 = arith.constant 0 : i32
    return %c0_i32, %c0_i32_0 : i32, i32
  }
  func.func @transform_2(%arg0: i32) -> (i32, i32) {
    %c0_i32 = arith.constant 0 : i32
    %c0_i32_0 = arith.constant 0 : i32
    %c0_i32_1 = arith.constant 0 : i32
    return %c0_i32, %c0_i32_0 : i32, i32
  }
  func.func @transform_3(%arg0: i32) -> (i32, i32) {
    %c0_i32 = arith.constant 0 : i32
    %c0_i32_0 = arith.constant 0 : i32
    return %arg0, %c0_i32 : i32, i32
  }
}

</mosaic_0001>

<llo_original>
// kernel: tpu_custom_call.1
$region0: #{tpu_custom_call.1}
  #allocation0 [shape = 'u32[]', space=smem, size = 0x4, offset = 0x4, fixed_abs, tag = 'smem constant byte address 0x4 - core index']
  #allocation1 [shape = 'u32[144,128]{1,0:T(1,128)}', space=vmem, size = 0x12000, scoped, tag = 'internal scratch']
  %s0 = inlined_call_operand.vmem [shape: bf16[256,16], index: 0, kind: input, shape index: {}]
  %s1 = inlined_call_operand.vmem [shape: bf16[16,32], index: 1, kind: input, shape index: {}]
  %s2 = inlined_call_operand.vmem [shape: f32[1,32], index: 2, kind: input, shape index: {}]
  %s3 = inlined_call_operand.vmem [shape: bf16[256,32], index: 3, kind: output, shape index: {}]
  %s4 = sld [smem:[#allocation0]]
  $region45: #{tpu_custom_call.1} parent=0
    _
  %s6 = ssub.s32 1, %s4
  %s7 = scalar_select 0, %s6, %s4
  loop: start=0, step=1, limit=4
  $region2: #{tpu_custom_call.1} parent=0 // loop_pre_header
    _
  $region3: #{tpu_custom_call.1} parent=0 // loop_header
    %s9 = sphi 0, %s13
    %p10 = scmp.ge.s32.totalorder %s9, 4
    %s19 = sphi 0, %s21
    %s22 = sphi 0, %s19
    %s23 = sphi 0, %s22
    %s39 = sphi 0, %s23
    %s43 = sphi 0, %s43
    %s45 = sphi 0, %s43
    %s46 = sphi 0, %s45
    %s60 = sphi 0, %s46
    %s64 = sphi 0, %s64
    %s66 = sphi 0, %s64
    %s67 = sphi 0, %s66
    %s81 = sphi 0, %s67
    %s87 = sphi 0, %s89
    %s90 = sphi 0, %s87
    %s91 = sphi 0, %s90
    %s107 = sphi 0, %s91
  $region4: #{tpu_custom_call.1} parent=0 // loop_header_branch
    %12 = sbr.rel (%p10) target = $region8
  $region5: #{tpu_custom_call.1} parent=0 // loop_body
    %s14 = ssub.s32 %s9, 1
    %s15 = ssub.s32 %s9, 2
    %s16 = sadd.s32 %s9, 1
    %s17 = ssub.s32 %s9, %s16
    %p18 = scmp.eq.s32.totalorder %s17, 0
    %s20 = sadd.s32 %s19, 1
    %s21 = scalar_select %p18, %s19, %s20
    %p24 = pneg %p18
    %p25 = scmp.eq.s32.totalorder %s9, 1
    %p26 = por %p24, %p25
    %p27 = scmp.ne.s32.totalorder %s19, %s22
    %p28 = scmp.eq.s32.totalorder %s9, 0
    %p29 = por %p27, %p28
    %p30 = scmp.ne.s32.totalorder %s19, %s22
    %p31 = scmp.eq.s32.totalorder %s14, 1
    %p32 = por %p30, %p31
    %p33 = scmp.ne.s32.totalorder %s22, %s23
    %p34 = scmp.eq.s32.totalorder %s14, 0
    %p35 = por %p33, %p34
    %p36 = scmp.ne.s32.totalorder %s22, %s23
    %p37 = scmp.eq.s32.totalorder %s15, 1
    %p38 = por %p36, %p37
    %p40 = scmp.ne.s32.totalorder %s23, %s39
    %p41 = scmp.eq.s32.totalorder %s15, 0
    %p42 = por %p40, %p41
    %s44 = sadd.s32 %s43, 1
    %p47 = scmp.eq.s32.totalorder %s9, 1
    %p48 = scmp.ne.s32.totalorder %s43, %s45
    %p49 = scmp.eq.s32.totalorder %s9, 0
    %p50 = por %p48, %p49
    %p51 = scmp.ne.s32.totalorder %s43, %s45
    %p52 = scmp.eq.s32.totalorder %s14, 1
    %p53 = por %p51, %p52
    %p54 = scmp.ne.s32.totalorder %s45, %s46
    %p55 = scmp.eq.s32.totalorder %s14, 0
    %p56 = por %p54, %p55
    %p57 = scmp.ne.s32.totalorder %s45, %s46
    %p58 = scmp.eq.s32.totalorder %s15, 1
    %p59 = por %p57, %p58
    %p61 = scmp.ne.s32.totalorder %s46, %s60
    %p62 = scmp.eq.s32.totalorder %s15, 0
    %p63 = por %p61, %p62
    %s65 = sadd.s32 %s64, 1
    %p68 = scmp.eq.s32.totalorder %s9, 1
    %p69 = scmp.ne.s32.totalorder %s64, %s66
    %p70 = scmp.eq.s32.totalorder %s9, 0
    %p71 = por %p69, %p70
    %p72 = scmp.ne.s32.totalorder %s64, %s66
    %p73 = scmp.eq.s32.totalorder %s14, 1
    %p74 = por %p72, %p73
    %p75 = scmp.ne.s32.totalorder %s66, %s67
    %p76 = scmp.eq.s32.totalorder %s14, 0
    %p77 = por %p75, %p76
    %p78 = scmp.ne.s32.totalorder %s66, %s67
    %p79 = scmp.eq.s32.totalorder %s15, 1
    %p80 = por %p78, %p79
    %p82 = scmp.ne.s32.totalorder %s67, %s81
    %p83 = scmp.eq.s32.totalorder %s15, 0
    %p84 = por %p82, %p83
    %s85 = ssub.s32 %s9, %s16
    %p86 = scmp.eq.s32.totalorder %s85, 0
    %s88 = sadd.s32 %s87, 1
    %s89 = scalar_select %p86, %s87, %s88
    %p92 = pneg %p86
    %p93 = scmp.eq.s32.totalorder %s9, 1
    %p94 = por %p92, %p93
    %p95 = scmp.ne.s32.totalorder %s87, %s90
    %p96 = scmp.eq.s32.totalorder %s9, 0
    %p97 = por %p95, %p96
    %p98 = scmp.ne.s32.totalorder %s87, %s90
    %p99 = scmp.eq.s32.totalorder %s14, 1
    %p100 = por %p98, %p99
    %p101 = scmp.ne.s32.totalorder %s90, %s91
    %p102 = scmp.eq.s32.totalorder %s14, 0
    %p103 = por %p101, %p102
    %p104 = scmp.ne.s32.totalorder %s90, %s91
    %p105 = scmp.eq.s32.totalorder %s15, 1
    %p106 = por %p104, %p105
    %p108 = scmp.ne.s32.totalorder %s91, %s107
    %p109 = scmp.eq.s32.totalorder %s15, 0
    %p110 = por %p108, %p109
    %p111 = scmp.le.s32.totalorder 1, %s9
    %p112 = scmp.lt.s32.totalorder %s9, 3
    %p113 = pnand %p111, %p112
    %p114 = pneg %p113
    // Predicated region
    $region9: #{tpu_custom_call.1} parent=5 // pred_check
      _
    $region10: #{tpu_custom_call.1} parent=5 // pred_check_branch
      %116 = sbr.rel (%p113) target = $region12
    $region11: #{tpu_custom_call.1} parent=5 // pred_region
      %s117 = ssub.s32 %s9, 1
      // Predicated region
      $region13: #{tpu_custom_call.1} parent=11 // pred_check
        %p118 = pneg %p56
      $region14: #{tpu_custom_call.1} parent=11 // pred_check_branch
        %120 = sbr.rel (%p118) target = $region16
      $region15: #{tpu_custom_call.1} parent=11 // pred_region
        _
      $region16: #{tpu_custom_call.1} parent=11 // pred_fallthru
        _
      // Predicated region
      $region17: #{tpu_custom_call.1} parent=11 // pred_check
        %p121 = pneg %p77
      $region18: #{tpu_custom_call.1} parent=11 // pred_check_branch
        %123 = sbr.rel (%p121) target = $region20
      $region19: #{tpu_custom_call.1} parent=11 // pred_region
        _
      $region20: #{tpu_custom_call.1} parent=11 // pred_fallthru
        _
    $region12: #{tpu_custom_call.1} parent=5 // pred_fallthru
      _
    %p124 = scmp.lt.s32.totalorder %s9, 2
    // Predicated region
    $region21: #{tpu_custom_call.1} parent=5 // pred_check
      %p125 = pneg %p124
    $region22: #{tpu_custom_call.1} parent=5 // pred_check_branch
      %127 = sbr.rel (%p125) target = $region24
    $region23: #{tpu_custom_call.1} parent=5 // pred_region
      // Predicated region
      $region25: #{tpu_custom_call.1} parent=23 // pred_check
        %p128 = pneg %p29
      $region26: #{tpu_custom_call.1} parent=23 // pred_check_branch
        %130 = sbr.rel (%p128) target = $region28
      $region27: #{tpu_custom_call.1} parent=23 // pred_region
        %s131 = smul.u32 16, %s9
        %p132 = scmp.lt.s32.totalorder %s131, 31
        %s133 = scalar_select %p132, %s131, 31
        %s134 = smul.addr %s133, 4
        %s135 = scalar_lea.vmem %s0, %s134
        %s136 = smul.u32 16, %s9
      $region28: #{tpu_custom_call.1} parent=23 // pred_fallthru
        _
    $region24: #{tpu_custom_call.1} parent=5 // pred_fallthru
      _
    %p137 = scmp.le.s32.totalorder 1, %s9
    %p138 = scmp.lt.s32.totalorder %s9, 3
    %p139 = pnand %p137, %p138
    %p140 = pneg %p139
    // Predicated region
    $region29: #{tpu_custom_call.1} parent=5 // pred_check
      _
    $region30: #{tpu_custom_call.1} parent=5 // pred_check_branch
      %142 = sbr.rel (%p139) target = $region32
    $region31: #{tpu_custom_call.1} parent=5 // pred_region
      %s143 = ssub.s32 %s9, 1
      %s144 = smul.u32 16, %s14
      %p145 = scmp.lt.s32.totalorder %s144, 31
      %s146 = scalar_select %p145, %s144, 31
      %s147 = smul.addr %s146, 4
      %s148 = scalar_lea.vmem %s0, %s147
      %p149 = pneg %p35
      %p150 = pneg %p32
      %p151 = pneg %p56
      %p152 = pneg %p53
      %p153 = pneg %p77
      %p154 = pneg %p74
      %p155 = pneg %p103
      %p156 = pneg %p100
      %s157 = smul.u32 16, %s14
      %p158 = scmp.lt.s32.totalorder %s157, 31
      %s159 = scalar_select %p158, %s157, 31
      %s160 = smul.addr %s159, 4
      %s161 = scalar_lea.vmem %s3, %s160
      %s162 = smul.u32 16, %s14
      %p163 = scmp.lt.s32.totalorder %s162, 31
      %s164 = scalar_select %p163, %s162, 31
      %s165 = smul.addr %s164, 4
      %s166 = scalar_lea.vmem %s0, %s165
      %s167 = smul.u32 16, %s14
      %s168 = smul.u32 16, %s14
      %p169 = scmp.lt.s32.totalorder %s168, 31
      %s170 = scalar_select %p169, %s168, 31
      %s171 = smul.addr %s170, 4
      %s172 = scalar_lea.vmem %s3, %s171
      %s173 = smul.u32 16, %s14
      %v175 = vld [vmem:[%s166] sm:$0xf]
      %v176 = vld [vmem:[%s166 + $0x4] sm:$0xf]
      %v177 = vld [vmem:[%s166 + $0x8] sm:$0xf]
      %v178 = vld [vmem:[%s166 + $0xc] sm:$0xf]
      %v179 = vld [vmem:[%s166 + $0x10] sm:$0xf]
      %v180 = vld [vmem:[%s166 + $0x14] sm:$0xf]
      %v181 = vld [vmem:[%s166 + $0x18] sm:$0xf]
      %v182 = vld [vmem:[%s166 + $0x1c] sm:$0xf]
      %v183 = vld [vmem:[%s166 + $0x20] sm:$0xf]
      %v184 = vld [vmem:[%s166 + $0x24] sm:$0xf]
      %v185 = vld [vmem:[%s166 + $0x28] sm:$0xf]
      %v186 = vld [vmem:[%s166 + $0x2c] sm:$0xf]
      %v187 = vld [vmem:[%s166 + $0x30] sm:$0xf]
      %v188 = vld [vmem:[%s166 + $0x34] sm:$0xf]
      %v189 = vld [vmem:[%s166 + $0x38] sm:$0xf]
      %v190 = vld [vmem:[%s166 + $0x3c] sm:$0xf]
      %v191 = vld [vmem:[%s1] sm:$0xf]
      %v192 = vld [vmem:[%s1 + $0x4] sm:$0xf]
      %v193 = vld [vmem:[%s2] sm:$0x1]
      %v195 = vlaneseq
      %v196 = vshrl.u32 %v195, 7
      %v197 = vsub.s32 0, %v196
      %v198 = vrot.slane %v193, %v197
      %v216 = vunpack.c.l.b16 %v175
      %v217 = vunpack.c.l.b16 %v176
      %v218 = vunpack.c.l.b16 %v177
      %v219 = vunpack.c.l.b16 %v178
      %v220 = vunpack.c.l.b16 %v179
      %v221 = vunpack.c.l.b16 %v180
      %v222 = vunpack.c.l.b16 %v181
      %v223 = vunpack.c.l.b16 %v182
      %v224 = vunpack.c.l.b16 %v183
      %v225 = vunpack.c.l.b16 %v184
      %v226 = vunpack.c.l.b16 %v185
      %v227 = vunpack.c.l.b16 %v186
      %v228 = vunpack.c.l.b16 %v187
      %v229 = vunpack.c.l.b16 %v188
      %v230 = vunpack.c.l.b16 %v189
      %v231 = vunpack.c.l.b16 %v190
      %v232 = vpack.c.b16 %v217, %v216
      %v233 = vpack.c.b16 %v219, %v218
      %v234 = vpack.c.b16 %v221, %v220
      %v235 = vpack.c.b16 %v223, %v222
      %v236 = vpack.c.b16 %v225, %v224
      %v237 = vpack.c.b16 %v227, %v226
      %v238 = vpack.c.b16 %v229, %v228
      %v239 = vpack.c.b16 %v231, %v230
      %v242 = vunpack.c.l.b16 %v191
      %v243 = vunpack.c.l.b16 %v192
      %v244 = vpack.c.b16 %v243, %v242
      %vm246 = vcmask 130048
      %v248 = vsel %vm246, %v232, 0
      %v251 = vsel %vm246, %v233, 0
      %v254 = vsel %vm246, %v234, 0
      %v257 = vsel %vm246, %v235, 0
      %v260 = vsel %vm246, %v236, 0
      %v263 = vsel %vm246, %v237, 0
      %v266 = vsel %vm246, %v238, 0
      %v269 = vsel %vm246, %v239, 0
      %271 = vmatprep.subr.bf16.mxu0 0
      %272 = vmatpush1.bf16.msra.mxu0 0
      %273 = vmatprep.subr.bf16.mxu0 0
      %274 = vmatpush1.bf16.msra.mxu0 0
      %275 = vmatprep.subr.bf16.mxu0 0
      %276 = vmatpush1.bf16.msra.mxu0 0
      %277 = vmatprep.subr.bf16.mxu0 0
      %278 = vmatpush1.bf16.msra.mxu0 0
      %279 = vmatprep.subr.bf16.mxu0 0
      %280 = vmatpush1.bf16.msra.mxu0 0
      %281 = vmatprep.subr.bf16.mxu0 0
      %282 = vmatpush1.bf16.msra.mxu0 0
      %283 = vmatprep.subr.bf16.mxu0 0
      %284 = vmatpush1.bf16.msra.mxu0 0
      %285 = vmatprep.subr.bf16.mxu0 0
      %286 = vmatpush1.bf16.msra.mxu0 %v244
      %287 = vmatprep.subr.bf16.mxu0 0
      %288 = vmatpush2.bf16.msra.mxu0 0
      %289 = vmatprep.subr.bf16.mxu0 0
      %290 = vmatpush2.bf16.msra.mxu0 0
      %291 = vmatprep.subr.bf16.mxu0 0
      %292 = vmatpush2.bf16.msra.mxu0 0
      %293 = vmatprep.subr.bf16.mxu0 0
      %294 = vmatpush2.bf16.msra.mxu0 0
      %295 = vmatprep.subr.bf16.mxu0 0
      %296 = vmatpush2.bf16.msra.mxu0 0
      %297 = vmatprep.subr.bf16.mxu0 0
      %298 = vmatpush2.bf16.msra.mxu0 0
      %299 = vmatprep.subr.bf16.mxu0 0
      %300 = vmatpush2.bf16.msra.mxu0 0
      %301 = vmatprep.subr.bf16.mxu0 0
      %302 = vmatpush2.bf16.msra.mxu0 0
      %303 = vmatprep.mubr.bf16.mxu0 0
      %304 = vmatmul.mubr.bf16.gmra.mxu0 %v248
      %v305 = vpop.f32.mrf.mxu0
      %v306 = vadd.f32 %v198, %v305
      %v307 = vpop.f32.mrf.mxu0
      %v308 = vpop.f32.mrf.mxu0
      %v309 = vadd.f32 %v198, %v308
      %v310 = vpop.f32.mrf.mxu0
      %311 = vmatprep.mubr.bf16.mxu0 0
      %312 = vmatmul.mubr.bf16.gmra.mxu0 %v251
      %v313 = vpop.f32.mrf.mxu0
      %v314 = vadd.f32 %v198, %v313
      %v315 = vpop.f32.mrf.mxu0
      %v316 = vpop.f32.mrf.mxu0
      %v317 = vadd.f32 %v198, %v316
      %v318 = vpop.f32.mrf.mxu0
      %319 = vmatprep.mubr.bf16.mxu0 0
      %320 = vmatmul.mubr.bf16.gmra.mxu0 %v254
      %v321 = vpop.f32.mrf.mxu0
      %v322 = vadd.f32 %v198, %v321
      %v323 = vpop.f32.mrf.mxu0
      %v324 = vpop.f32.mrf.mxu0
      %v325 = vadd.f32 %v198, %v324
      %v326 = vpop.f32.mrf.mxu0
      %327 = vmatprep.mubr.bf16.mxu0 0
      %328 = vmatmul.mubr.bf16.gmra.mxu0 %v257
      %v329 = vpop.f32.mrf.mxu0
      %v330 = vadd.f32 %v198, %v329
      %v331 = vpop.f32.mrf.mxu0
      %v332 = vpop.f32.mrf.mxu0
      %v333 = vadd.f32 %v198, %v332
      %v334 = vpop.f32.mrf.mxu0
      %335 = vmatprep.mubr.bf16.mxu0 0
      %336 = vmatmul.mubr.bf16.gmra.mxu0 %v260
      %v337 = vpop.f32.mrf.mxu0
      %v338 = vadd.f32 %v198, %v337
      %v339 = vpop.f32.mrf.mxu0
      %v340 = vpop.f32.mrf.mxu0
      %v341 = vadd.f32 %v198, %v340
      %v342 = vpop.f32.mrf.mxu0
      %343 = vmatprep.mubr.bf16.mxu0 0
      %344 = vmatmul.mubr.bf16.gmra.mxu0 %v263
      %v345 = vpop.f32.mrf.mxu0
      %v346 = vadd.f32 %v198, %v345
      %v347 = vpop.f32.mrf.mxu0
      %v348 = vpop.f32.mrf.mxu0
      %v349 = vadd.f32 %v198, %v348
      %v350 = vpop.f32.mrf.mxu0
      %351 = vmatprep.mubr.bf16.mxu0 0
      %352 = vmatmul.mubr.bf16.gmra.mxu0 %v266
      %v353 = vpop.f32.mrf.mxu0
      %v354 = vadd.f32 %v198, %v353
      %v355 = vpop.f32.mrf.mxu0
      %v356 = vpop.f32.mrf.mxu0
      %v357 = vadd.f32 %v198, %v356
      %v358 = vpop.f32.mrf.mxu0
      %359 = vmatprep.mubr.bf16.mxu0 0
      %360 = vmatmul.mubr.bf16.gmra.mxu0 %v269
      %v361 = vpop.f32.mrf.mxu0
      %v362 = vadd.f32 %v198, %v361
      %v363 = vpop.f32.mrf.mxu0
      %v364 = vpop.f32.mrf.mxu0
      %v365 = vadd.f32 %v198, %v364
      %v366 = vpop.f32.mrf.mxu0
      %367 = vdwg.mxu0
      %v368 = vpack.c.bf16 %v309, %v306
      %v369 = vpack.c.bf16 %v317, %v314
      %v370 = vpack.c.bf16 %v325, %v322
      %v371 = vpack.c.bf16 %v333, %v330
      %v372 = vpack.c.bf16 %v341, %v338
      %v373 = vpack.c.bf16 %v349, %v346
      %v374 = vpack.c.bf16 %v357, %v354
      %v375 = vpack.c.bf16 %v365, %v362
      %v384 = vunpack.c.l.b16 %v368
      %v385 = vunpack.c.h.b16 %v368
      %v386 = vunpack.c.l.b16 %v369
      %v387 = vunpack.c.h.b16 %v369
      %v388 = vunpack.c.l.b16 %v370
      %v389 = vunpack.c.h.b16 %v370
      %v390 = vunpack.c.l.b16 %v371
      %v391 = vunpack.c.h.b16 %v371
      %v392 = vunpack.c.l.b16 %v372
      %v393 = vunpack.c.h.b16 %v372
      %v394 = vunpack.c.l.b16 %v373
      %v395 = vunpack.c.h.b16 %v373
      %v396 = vunpack.c.l.b16 %v374
      %v397 = vunpack.c.h.b16 %v374
      %v398 = vunpack.c.l.b16 %v375
      %v399 = vunpack.c.h.b16 %v375
      %v400 = vpack.c.b16 %v384, %v384
      %v401 = vpack.c.b16 %v385, %v385
      %v402 = vpack.c.b16 %v386, %v386
      %v403 = vpack.c.b16 %v387, %v387
      %v404 = vpack.c.b16 %v388, %v388
      %v405 = vpack.c.b16 %v389, %v389
      %v406 = vpack.c.b16 %v390, %v390
      %v407 = vpack.c.b16 %v391, %v391
      %v408 = vpack.c.b16 %v392, %v392
      %v409 = vpack.c.b16 %v393, %v393
      %v410 = vpack.c.b16 %v394, %v394
      %v411 = vpack.c.b16 %v395, %v395
      %v412 = vpack.c.b16 %v396, %v396
      %v413 = vpack.c.b16 %v397, %v397
      %v414 = vpack.c.b16 %v398, %v398
      %v415 = vpack.c.b16 %v399, %v399
      %vm432 = vcmask 257024
      %433 = vst.msk [vmem:[%s172] sm:$0xf] %vm432, %v400
      %434 = vst.msk [vmem:[%s172 + $0x4] sm:$0xf] %vm432, %v401
      %435 = vst.msk [vmem:[%s172 + $0x8] sm:$0xf] %vm432, %v402
      %436 = vst.msk [vmem:[%s172 + $0xc] sm:$0xf] %vm432, %v403
      %437 = vst.msk [vmem:[%s172 + $0x10] sm:$0xf] %vm432, %v404
      %438 = vst.msk [vmem:[%s172 + $0x14] sm:$0xf] %vm432, %v405
      %439 = vst.msk [vmem:[%s172 + $0x18] sm:$0xf] %vm432, %v406
      %440 = vst.msk [vmem:[%s172 + $0x1c] sm:$0xf] %vm432, %v407
      %441 = vst.msk [vmem:[%s172 + $0x20] sm:$0xf] %vm432, %v408
      %442 = vst.msk [vmem:[%s172 + $0x24] sm:$0xf] %vm432, %v409
      %443 = vst.msk [vmem:[%s172 + $0x28] sm:$0xf] %vm432, %v410
      %444 = vst.msk [vmem:[%s172 + $0x2c] sm:$0xf] %vm432, %v411
      %445 = vst.msk [vmem:[%s172 + $0x30] sm:$0xf] %vm432, %v412
      %446 = vst.msk [vmem:[%s172 + $0x34] sm:$0xf] %vm432, %v413
      %447 = vst.msk [vmem:[%s172 + $0x38] sm:$0xf] %vm432, %v414
      %448 = vst.msk [vmem:[%s172 + $0x3c] sm:$0xf] %vm432, %v415
      %s449 = smul.u32 16, %s14
      %p450 = scmp.lt.s32.totalorder %s449, 31
      %s451 = scalar_select %p450, %s449, 31
      %s452 = smul.addr %s451, 4
      %s453 = scalar_lea.vmem %s3, %s452
      // Predicated region
      $region33: #{tpu_custom_call.1} parent=31 // pred_check
        %p454 = pneg %p100
      $region34: #{tpu_custom_call.1} parent=31 // pred_check_branch
        %456 = sbr.rel (%p454) target = $region36
      $region35: #{tpu_custom_call.1} parent=31 // pred_region
        %s457 = smul.u32 16, %s14
      $region36: #{tpu_custom_call.1} parent=31 // pred_fallthru
        _
    $region32: #{tpu_custom_call.1} parent=5 // pred_fallthru
      _
    %p458 = scmp.le.s32.totalorder 2, %s9
    // Predicated region
    $region37: #{tpu_custom_call.1} parent=5 // pred_check
      %p459 = pneg %p458
    $region38: #{tpu_custom_call.1} parent=5 // pred_check_branch
      %461 = sbr.rel (%p459) target = $region40
    $region39: #{tpu_custom_call.1} parent=5 // pred_region
      %s462 = ssub.s32 %s9, 2
      // Predicated region
      $region41: #{tpu_custom_call.1} parent=39 // pred_check
        %p463 = pneg %p106
      $region42: #{tpu_custom_call.1} parent=39 // pred_check_branch
        %465 = sbr.rel (%p463) target = $region44
      $region43: #{tpu_custom_call.1} parent=39 // pred_region
        %s466 = smul.u32 16, %s15
        %p467 = scmp.lt.s32.totalorder %s466, 31
        %s468 = scalar_select %p467, %s466, 31
        %s469 = smul.addr %s468, 4
        %s470 = scalar_lea.vmem %s3, %s469
      $region44: #{tpu_custom_call.1} parent=39 // pred_fallthru
        _
    $region40: #{tpu_custom_call.1} parent=5 // pred_fallthru
      _
  $region6: #{tpu_custom_call.1} parent=0 // loop_footer
    %s13 = sadd.s32 1, %s9
  $region7: #{tpu_custom_call.1} parent=0 // loop_footer_branch
    %8 = sbr.rel target = $region3
  $region8: #{tpu_custom_call.1} parent=0 // loop_exit
    _

</llo_original>
